<compile_context>
chip_gen: v7x
topology: tpu7x:2x2x1
jax: 0.10.0
libtpu: 0.0.40
codegen_flags: <defaults>
</compile_context>

<pallas_src>
import functools

import jax
import jax.numpy as jnp
from jax.experimental import pallas as pl
from jax.experimental.pallas import tpu as pltpu

BN_EPS = 1e-5
GIN_EPS = 0.0        # GINConv default eps
LANES = 128
OUT_PAD = 128        # lane-dense padded width of the 1-wide fc output


def _round_up(v, m):
    return (v + m - 1) // m * m


def gin_kernel(a_ref, x_ref, w1_ref, b1_ref, w2_ref, b2_ref, wfc_ref, bfc_ref,
               out_ref, acc_ref):
    k = pl.program_id(1)

    @pl.when(k == 0)
    def _():
        acc_ref[...] = jnp.zeros_like(acc_ref)

    # GIN aggregation partial sum on the MXU: acc += A[i, k] @ x[k].
    # The (1+eps)*x self term is folded onto A's diagonal in the wrapper.
    acc_ref[...] += jnp.dot(a_ref[...], x_ref[...],
                            preferred_element_type=jnp.float32)

    @pl.when(k == pl.num_programs(1) - 1)
    def _():
        # MLP + head (BatchNorm already folded into W2/b2 and Wfc/bfc).
        h = acc_ref[...].astype(w1_ref.dtype)
        h = jnp.dot(h, w1_ref[...],
                    preferred_element_type=jnp.float32) + b1_ref[...]
        h = jnp.maximum(h, 0.0)
        h = jnp.dot(h.astype(w2_ref.dtype), w2_ref[...],
                    preferred_element_type=jnp.float32) + b2_ref[...]
        h = jnp.maximum(h, 0.0)
        # Dropout (eval mode) is identity; fc output is padded to 128 lanes.
        out = jnp.dot(h.astype(wfc_ref.dtype), wfc_ref[...],
                      preferred_element_type=jnp.float32) + bfc_ref[...]
        out_ref[...] = out.astype(out_ref.dtype)


def gin_forward(params, x, edge_index, *, matmul_dtype=jnp.bfloat16, tile=512):
    """x: [N, nfeat] f32, edge_index: [2, E] int32 (row0=src, row1=dst)."""
    n, nfeat = x.shape
    nhid = params["w1"].shape[1]

    fp = _round_up(nfeat, LANES)
    hp = _round_up(nhid, LANES)
    np_ = _round_up(n, LANES)
    if np_ <= tile:
        tm = tk = np_
    else:
        tm = tk = tile
        np_ = _round_up(np_, tile)

    # Dense in-adjacency with the GINConv self term on the diagonal:
    #   A[dst, src] += 1 ; A[i, i] += (1+eps)  =>  (A @ x)[i] = (1+eps)x_i + sum x_src
    # Counts are small integers -> exact in bf16 (exact up to 256).
    src, dst = edge_index[0], edge_index[1]
    idx = jnp.arange(n)
    adj = (jnp.zeros((np_, np_), jnp.float32)
           .at[dst, src].add(1.0)
           .at[idx, idx].add(1.0 + GIN_EPS)).astype(matmul_dtype)

    xp = jnp.zeros((np_, fp), matmul_dtype).at[:n, :nfeat].set(
        x.astype(matmul_dtype))

    # Fold BatchNorm (eval mode, running stats) into the following Linear.
    s1 = params["g1"] * jax.lax.rsqrt(params["v1"] + BN_EPS)     # (1, nhid)
    t1 = params["be1"] - params["m1"] * s1
    w2f = params["w2"] * s1.reshape(-1, 1)
    b2f = params["b2"] + t1 @ params["w2"]
    s2 = params["g2"] * jax.lax.rsqrt(params["v2"] + BN_EPS)
    t2 = params["be2"] - params["m2"] * s2
    wff = params["wfc"] * s2.reshape(-1, 1)
    bff = params["bfc"] + t2 @ params["wfc"]

    def pad_w(w, r, c):
        return jnp.zeros((r, c), matmul_dtype).at[:w.shape[0], :w.shape[1]].set(
            w.astype(matmul_dtype))

    def pad_b(b, c):
        return jnp.zeros((1, c), jnp.float32).at[:, :b.shape[1]].set(
            b.astype(jnp.float32))

    w1p, b1p = pad_w(params["w1"], fp, hp), pad_b(params["b1"], hp)
    w2p, b2p = pad_w(w2f, hp, hp), pad_b(b2f, hp)
    wfp, bfp = pad_w(wff, hp, OUT_PAD), pad_b(bff, OUT_PAD)

    grid = (np_ // tm, np_ // tk)
    item = jnp.dtype(matmul_dtype).itemsize

    # Double-buffered streamed tiles + resident weights + f32 accumulator.
    vmem_need = (2 * (tm * tk + tk * fp + fp * hp + hp * hp + hp * OUT_PAD) * item
                 + 2 * tm * OUT_PAD * 4      # output tile (f32, double buffered)
                 + tm * fp * 4               # accumulator scratch
                 + 2 * (2 * hp + OUT_PAD) * 4)  # biases
    vmem_limit = int(min(max(2 * vmem_need, 8 << 20), 48 << 20))

    cost = pl.CostEstimate(
        flops=(2 * np_ * np_ * fp
               + np_ * (2 * fp * hp + 2 * hp * hp + 2 * hp * OUT_PAD)),
        transcendentals=0,
        bytes_accessed=(np_ * np_ * item                 # A streamed once
                        + grid[0] * np_ * fp * item      # x re-read per row tile
                        + np_ * OUT_PAD * 4              # output
                        + (fp * hp + hp * hp + hp * OUT_PAD) * item),
    )

    out = pl.pallas_call(
        gin_kernel,
        out_shape=jax.ShapeDtypeStruct((np_, OUT_PAD), jnp.float32),
        grid_spec=pltpu.PrefetchScalarGridSpec(
            num_scalar_prefetch=0,
            grid=grid,
            in_specs=[
                pl.BlockSpec((tm, tk), lambda i, k: (i, k)),        # A tile
                pl.BlockSpec((tk, fp), lambda i, k: (k, 0)),        # x rows (reduction)
                pl.BlockSpec((fp, hp), lambda i, k: (0, 0)),        # W1 (resident)
                pl.BlockSpec((1, hp), lambda i, k: (0, 0)),         # b1
                pl.BlockSpec((hp, hp), lambda i, k: (0, 0)),        # W2 (BN1 folded)
                pl.BlockSpec((1, hp), lambda i, k: (0, 0)),         # b2
                pl.BlockSpec((hp, OUT_PAD), lambda i, k: (0, 0)),   # Wfc (BN2 folded)
                pl.BlockSpec((1, OUT_PAD), lambda i, k: (0, 0)),    # bfc
            ],
            out_specs=pl.BlockSpec((tm, OUT_PAD), lambda i, k: (i, 0)),
            scratch_shapes=[pltpu.VMEM((tm, fp), jnp.float32)],
        ),
        compiler_params=pltpu.CompilerParams(
            dimension_semantics=("parallel", "arbitrary"),
            vmem_limit_bytes=vmem_limit,
        ),
        cost_estimate=cost,
    )(adj, xp, w1p, b1p, w2p, b2p, wfp, bfp)

    return out[:n, :1]


def xavier_uniform(key, fan_in, fan_out):
    bound = (6.0 / (fan_in + fan_out)) ** 0.5
    # PyTorch stores Linear weight as [out, in]; we store [in, out] for x @ W.
    return jax.random.uniform(key, (fan_in, fan_out), jnp.float32, -bound, bound)


def init_params(key, nfeat, nhid):
    k1, k2, k3 = jax.random.split(key, 3)
    ones = lambda m: jnp.ones((1, m), jnp.float32)
    zeros = lambda m: jnp.zeros((1, m), jnp.float32)
    return {
        # mlp1: Linear(nfeat, nhid), BN(nhid), Linear(nhid, nhid), BN(nhid)
        "w1": xavier_uniform(k1, nfeat, nhid), "b1": zeros(nhid),
        "g1": ones(nhid), "be1": zeros(nhid), "m1": zeros(nhid), "v1": ones(nhid),
        "w2": xavier_uniform(k2, nhid, nhid), "b2": zeros(nhid),
        "g2": ones(nhid), "be2": zeros(nhid), "m2": zeros(nhid), "v2": ones(nhid),
        # fc: Linear(nhid, 1)
        "wfc": xavier_uniform(k3, nhid, 1), "bfc": zeros(1),
    }


def gin_reference(params, x, edge_index):
    """Plain-JAX f32 reference matching the PyTorch eval-mode forward."""
    n = x.shape[0]
    adj = jnp.zeros((n, n), jnp.float32).at[edge_index[1], edge_index[0]].add(1.0)
    h = (1.0 + GIN_EPS) * x + adj @ x
    h = jnp.maximum(h @ params["w1"] + params["b1"], 0.0)
    h = (h - params["m1"]) / jnp.sqrt(params["v1"] + BN_EPS) * params["g1"] + params["be1"]
    h = jnp.maximum(h @ params["w2"] + params["b2"], 0.0)
    h = (h - params["m2"]) / jnp.sqrt(params["v2"] + BN_EPS) * params["g2"] + params["be2"]
    return h @ params["wfc"] + params["bfc"]


if __name__ == "__main__":
    N, E, NFEAT, NHID = 32, 64, 16, 32
    key = jax.random.PRNGKey(0)
    kx, ke, kp = jax.random.split(key, 3)

    x = jax.random.normal(kx, (N, NFEAT), jnp.float32)
    edge_index = jax.random.randint(ke, (2, E), 0, N, jnp.int32)
    params = init_params(kp, NFEAT, NHID)

    ref = gin_reference(params, x, edge_index)

    # f32 MXU path (precision check).
    fwd_f32 = jax.jit(functools.partial(gin_forward, matmul_dtype=jnp.float32))
    out_f32 = jax.block_until_ready(fwd_f32(params, x, edge_index))
    assert out_f32.shape == (N, 1)
    assert jnp.allclose(out_f32, ref, atol=1e-3, rtol=1e-3), "f32 path mismatch"

    # bf16 MXU path (default performance path, f32 accumulation).
    fwd_bf16 = jax.jit(functools.partial(gin_forward, matmul_dtype=jnp.bfloat16))
    out_bf16 = jax.block_until_ready(fwd_bf16(params, x, edge_index))
    assert out_bf16.shape == (N, 1)
    assert jnp.allclose(out_bf16, ref, atol=5e-2, rtol=5e-2), "bf16 path mismatch"

    # TODO(synk): training-mode dropout / batch-statistics BatchNorm are not
    # reproduced (inference semantics only).
    print("KERNEL_OK")
</pallas_src>

<mosaic_0001>
module attributes {stable_mosaic.version = 11 : i64} {
  func.func private @main(%arg0: i32) attributes {dimension_semantics = [#tpu.dimension_semantics<core_parallel>], iteration_bounds = array<i64: 2>, tpu.core_type = #tpu.core_type<sc_scalar_subcore>, window_params = []} {
    return
  }
}

module attributes {stable_mosaic.version = 11 : i64} {
  func.func private @main(%arg0: i32) attributes {dimension_semantics = [#tpu.dimension_semantics<core_parallel>], iteration_bounds = array<i64: 2>, tpu.core_type = #tpu.core_type<sc_scalar_subcore>, window_params = []} {
    return
  }
}

module attributes {stable_mosaic.version = 11 : i64} {
  func.func @gin_kernel(%arg0: i32, %arg1: i32, %arg2: memref<128x128xf32, #tpu.memory_space<vmem>>, %arg3: memref<128x128xf32, #tpu.memory_space<vmem>>, %arg4: memref<128x128xf32, #tpu.memory_space<vmem>>, %arg5: memref<1x128xf32, #tpu.memory_space<vmem>>, %arg6: memref<128x128xf32, #tpu.memory_space<vmem>>, %arg7: memref<1x128xf32, #tpu.memory_space<vmem>>, %arg8: memref<128x128xf32, #tpu.memory_space<vmem>>, %arg9: memref<1x128xf32, #tpu.memory_space<vmem>>, %arg10: memref<128x128xf32, #tpu.memory_space<vmem>>, %arg11: memref<128x128xf32, #tpu.memory_space<vmem>>) attributes {dimension_semantics = [#tpu.dimension_semantics<parallel>, #tpu.dimension_semantics<arbitrary>], iteration_bounds = array<i64: 1, 1>, scalar_prefetch = 0 : i64, scratch_operands = 1 : i64, tpu.core_type = #tpu.core_type<tc>, window_params = [{transform_indices = @transform_0, window_bounds = array<i64: 128, 128>}, {transform_indices = @transform_1, window_bounds = array<i64: 128, 128>}, {pipeline_mode = #tpu.pipeline_mode<synchronous>, transform_indices = @transform_2, window_bounds = array<i64: 128, 128>}, {pipeline_mode = #tpu.pipeline_mode<synchronous>, transform_indices = @transform_3, window_bounds = array<i64: 1, 128>}, {pipeline_mode = #tpu.pipeline_mode<synchronous>, transform_indices = @transform_4, window_bounds = array<i64: 128, 128>}, {pipeline_mode = #tpu.pipeline_mode<synchronous>, transform_indices = @transform_5, window_bounds = array<i64: 1, 128>}, {pipeline_mode = #tpu.pipeline_mode<synchronous>, transform_indices = @transform_6, window_bounds = array<i64: 128, 128>}, {pipeline_mode = #tpu.pipeline_mode<synchronous>, transform_indices = @transform_7, window_bounds = array<i64: 1, 128>}, {transform_indices = @transform_8, window_bounds = array<i64: 128, 128>}]} {
    %c0_i32 = arith.constant 0 : i32
    %0 = arith.cmpi eq, %arg1, %c0_i32 : i32
    %1 = arith.extui %0 : i1 to i32
    %c0_i32_0 = arith.constant 0 : i32
    %2 = arith.cmpi ne, %1, %c0_i32_0 : i32
    scf.if %2 {
      %cst_10 = arith.constant 0.000000e+00 : f32
      %12 = vector.broadcast %cst_10 : f32 to vector<128x128xf32>
      %c0_11 = arith.constant 0 : index
      %c0_12 = arith.constant 0 : index
      %13 = vector.load %arg11[%c0_11, %c0_12] : memref<128x128xf32, #tpu.memory_space<vmem>>, vector<128x128xf32>
      tpu.vector_store %arg11[%c0_11, %c0_12], %12 {strides = array<i32>} : memref<128x128xf32, #tpu.memory_space<vmem>>, vector<128x128xf32>,
    } else {
    }
    %c0 = arith.constant 0 : index
    %c0_1 = arith.constant 0 : index
    %3 = vector.load %arg11[%c0, %c0_1] : memref<128x128xf32, #tpu.memory_space<vmem>>, vector<128x128xf32>
    %c0_2 = arith.constant 0 : index
    %c0_3 = arith.constant 0 : index
    %4 = vector.load %arg2[%c0_2, %c0_3] : memref<128x128xf32, #tpu.memory_space<vmem>>, vector<128x128xf32>
    %c0_4 = arith.constant 0 : index
    %c0_5 = arith.constant 0 : index
    %5 = vector.load %arg3[%c0_4, %c0_5] : memref<128x128xf32, #tpu.memory_space<vmem>>, vector<128x128xf32>
    %cst = arith.constant dense<0.000000e+00> : vector<128x128xf32>
    %6 = tpu.matmul %4, %5, %cst {dimension_numbers = #tpu.dot_dimension_numbers<[1], [0], [0], [1], [0, 0, 1, 1], [], []>} : vector<128x128xf32>, vector<128x128xf32>, vector<128x128xf32> -> vector<128x128xf32>
    %7 = arith.addf %3, %6 : vector<128x128xf32>
    %c0_6 = arith.constant 0 : index
    %c0_7 = arith.constant 0 : index
    %8 = vector.load %arg11[%c0_6, %c0_7] : memref<128x128xf32, #tpu.memory_space<vmem>>, vector<128x128xf32>
    tpu.vector_store %arg11[%c0_6, %c0_7], %7 {strides = array<i32>} : memref<128x128xf32, #tpu.memory_space<vmem>>, vector<128x128xf32>,
    %c0_i32_8 = arith.constant 0 : i32
    %9 = arith.cmpi eq, %arg1, %c0_i32_8 : i32
    %10 = arith.extui %9 : i1 to i32
    %c0_i32_9 = arith.constant 0 : i32
    %11 = arith.cmpi ne, %10, %c0_i32_9 : i32
    scf.if %11 {
      %c0_10 = arith.constant 0 : index
      %c0_11 = arith.constant 0 : index
      %12 = vector.load %arg11[%c0_10, %c0_11] : memref<128x128xf32, #tpu.memory_space<vmem>>, vector<128x128xf32>
      %c0_12 = arith.constant 0 : index
      %c0_13 = arith.constant 0 : index
      %13 = vector.load %arg4[%c0_12, %c0_13] : memref<128x128xf32, #tpu.memory_space<vmem>>, vector<128x128xf32>
      %cst_14 = arith.constant dense<0.000000e+00> : vector<128x128xf32>
      %14 = tpu.matmul %12, %13, %cst_14 {dimension_numbers = #tpu.dot_dimension_numbers<[1], [0], [0], [1], [0, 0, 1, 1], [], []>} : vector<128x128xf32>, vector<128x128xf32>, vector<128x128xf32> -> vector<128x128xf32>
      %c0_15 = arith.constant 0 : index
      %c0_16 = arith.constant 0 : index
      %15 = vector.load %arg5[%c0_15, %c0_16] : memref<1x128xf32, #tpu.memory_space<vmem>>, vector<1x128xf32>
      %16 = vector.broadcast %15 : vector<1x128xf32> to vector<128x128xf32>
      %17 = arith.addf %14, %16 : vector<128x128xf32>
      %cst_17 = arith.constant 0.000000e+00 : f32
      %18 = vector.broadcast %cst_17 : f32 to vector<128x128xf32>
      %19 = arith.maximumf %17, %18 : vector<128x128xf32>
      %c0_18 = arith.constant 0 : index
      %c0_19 = arith.constant 0 : index
      %20 = vector.load %arg6[%c0_18, %c0_19] : memref<128x128xf32, #tpu.memory_space<vmem>>, vector<128x128xf32>
      %cst_20 = arith.constant dense<0.000000e+00> : vector<128x128xf32>
      %21 = tpu.matmul %19, %20, %cst_20 {dimension_numbers = #tpu.dot_dimension_numbers<[1], [0], [0], [1], [0, 0, 1, 1], [], []>} : vector<128x128xf32>, vector<128x128xf32>, vector<128x128xf32> -> vector<128x128xf32>
      %c0_21 = arith.constant 0 : index
      %c0_22 = arith.constant 0 : index
      %22 = vector.load %arg7[%c0_21, %c0_22] : memref<1x128xf32, #tpu.memory_space<vmem>>, vector<1x128xf32>
      %23 = vector.broadcast %22 : vector<1x128xf32> to vector<128x128xf32>
      %24 = arith.addf %21, %23 : vector<128x128xf32>
      %cst_23 = arith.constant 0.000000e+00 : f32
      %25 = vector.broadcast %cst_23 : f32 to vector<128x128xf32>
      %26 = arith.maximumf %24, %25 : vector<128x128xf32>
      %c0_24 = arith.constant 0 : index
      %c0_25 = arith.constant 0 : index
      %27 = vector.load %arg8[%c0_24, %c0_25] : memref<128x128xf32, #tpu.memory_space<vmem>>, vector<128x128xf32>
      %cst_26 = arith.constant dense<0.000000e+00> : vector<128x128xf32>
      %28 = tpu.matmul %26, %27, %cst_26 {dimension_numbers = #tpu.dot_dimension_numbers<[1], [0], [0], [1], [0, 0, 1, 1], [], []>} : vector<128x128xf32>, vector<128x128xf32>, vector<128x128xf32> -> vector<128x128xf32>
      %c0_27 = arith.constant 0 : index
      %c0_28 = arith.constant 0 : index
      %29 = vector.load %arg9[%c0_27, %c0_28] : memref<1x128xf32, #tpu.memory_space<vmem>>, vector<1x128xf32>
      %30 = vector.broadcast %29 : vector<1x128xf32> to vector<128x128xf32>
      %31 = arith.addf %28, %30 : vector<128x128xf32>
      %c0_29 = arith.constant 0 : index
      %c0_30 = arith.constant 0 : index
      %32 = vector.load %arg10[%c0_29, %c0_30] : memref<128x128xf32, #tpu.memory_space<vmem>>, vector<128x128xf32>
      tpu.vector_store %arg10[%c0_29, %c0_30], %31 {strides = array<i32>} : memref<128x128xf32, #tpu.memory_space<vmem>>, vector<128x128xf32>,
    } else {
    }
    return
  }
  func.func @transform_0(%arg0: i32, %arg1: i32) -> (i32, i32) {
    %c0_i32 = arith.constant 0 : i32
    return %arg0, %arg1 : i32, i32
  }
  func.func @transform_1(%arg0: i32, %arg1: i32) -> (i32, i32) {
    %c0_i32 = arith.constant 0 : i32
    %c0_i32_0 = arith.constant 0 : i32
    return %arg1, %c0_i32 : i32, i32
  }
  func.func @transform_2(%arg0: i32, %arg1: i32) -> (i32, i32) {
    %c0_i32 = arith.constant 0 : i32
    %c0_i32_0 = arith.constant 0 : i32
    %c0_i32_1 = arith.constant 0 : i32
    return %c0_i32, %c0_i32_0 : i32, i32
  }
  func.func @transform_3(%arg0: i32, %arg1: i32) -> (i32, i32) {
    %c0_i32 = arith.constant 0 : i32
    %c0_i32_0 = arith.constant 0 : i32
    %c0_i32_1 = arith.constant 0 : i32
    return %c0_i32, %c0_i32_0 : i32, i32
  }
  func.func @transform_4(%arg0: i32, %arg1: i32) -> (i32, i32) {
    %c0_i32 = arith.constant 0 : i32
    %c0_i32_0 = arith.constant 0 : i32
    %c0_i32_1 = arith.constant 0 : i32
    return %c0_i32, %c0_i32_0 : i32, i32
  }
  func.func @transform_5(%arg0: i32, %arg1: i32) -> (i32, i32) {
    %c0_i32 = arith.constant 0 : i32
    %c0_i32_0 = arith.constant 0 : i32
    %c0_i32_1 = arith.constant 0 : i32
    return %c0_i32, %c0_i32_0 : i32, i32
  }
  func.func @transform_6(%arg0: i32, %arg1: i32) -> (i32, i32) {
    %c0_i32 = arith.constant 0 : i32
    %c0_i32_0 = arith.constant 0 : i32
    %c0_i32_1 = arith.constant 0 : i32
    return %c0_i32, %c0_i32_0 : i32, i32
  }
  func.func @transform_7(%arg0: i32, %arg1: i32) -> (i32, i32) {
    %c0_i32 = arith.constant 0 : i32
    %c0_i32_0 = arith.constant 0 : i32
    %c0_i32_1 = arith.constant 0 : i32
    return %c0_i32, %c0_i32_0 : i32, i32
  }
  func.func @transform_8(%arg0: i32, %arg1: i32) -> (i32, i32) {
    %c0_i32 = arith.constant 0 : i32
    %c0_i32_0 = arith.constant 0 : i32
    return %arg0, %c0_i32 : i32, i32
  }
}

</mosaic_0001>

<llo_original>
// kernel: gin_forward.1
$region0: #{gin_forward.1}
  #allocation0 [shape = 'u32[]', space=smem, size = 0x4, offset = 0x4, fixed_abs, tag = 'smem constant byte address 0x4 - core index']
  #allocation1 [shape = 'u32[144,128]{1,0:T(1,128)}', space=vmem, size = 0x12000, scoped, tag = 'internal scratch']
  #allocation2 [shape = 'f32[128,128]{1,0:T(8,128)}', space=vmem, size = 0x10000, scoped, tag = 'scratch operand']
  %s0 = inlined_call_operand.hbm [shape: f32[128,128], index: 0, kind: input, shape index: {}]
  %s1 = inlined_call_operand.vmem [shape: f32[128,128], index: 1, kind: input, shape index: {}]
  %s2 = inlined_call_operand.vmem [shape: f32[128,128], index: 2, kind: input, shape index: {}]
  %s3 = inlined_call_operand.vmem [shape: f32[1,128], index: 3, kind: input, shape index: {}]
  %s4 = inlined_call_operand.vmem [shape: f32[128,128], index: 4, kind: input, shape index: {}]
  %s5 = inlined_call_operand.vmem [shape: f32[1,128], index: 5, kind: input, shape index: {}]
  %s6 = inlined_call_operand.vmem [shape: f32[128,128], index: 6, kind: input, shape index: {}]
  %s7 = inlined_call_operand.vmem [shape: f32[1,128], index: 7, kind: input, shape index: {}]
  %s8 = inlined_call_operand.vmem [shape: f32[128,128], index: 8, kind: output, shape index: {}]
  %s9 = sld [smem:[#allocation0]]
  $region54: #{gin_forward.1} parent=0
    _
  %s11 = ssub.s32 1, %s9
  %s12 = scalar_select 0, %s11, %s9
  $region1: #{gin_forward.1} parent=0
    #allocation3 [shape = 'u8[65536]{0}', space=vmem, size = 0x10000, scoped, tag = 'input window, operand 0, single buffered']
    #allocation4 [shape = 's32[1]{0}', space=sflag, size = 0x4, scoped, tag = 'scoped memory for gin_forward.1']
    %13 = vsyncpa [#allocation4], 0
    // Predicated region
    $region2: #{gin_forward.1} parent=1 // pred_check
      _
    $region3: #{gin_forward.1} parent=1 // pred_check_branch
      %15 = sbr.rel (0) target = $region5
    $region4: #{gin_forward.1} parent=1 // pred_region
      %s17 = ssub.s32 2048, 2048
      %18 = vsyncadd [#allocation4], %s17
      %s19 = sshll.u32 [#allocation3], 4
      %s20 = int_to_ptr.vmem [resolvable:$true] %s19
      %25 = dma.hbm_to_vmem [thread:$0]  %s0, 2048, %s20, [#allocation4], 128, 128, 8
    $region5: #{gin_forward.1} parent=1 // pred_fallthru
      _
    // Predicated region
    $region6: #{gin_forward.1} parent=1 // pred_check
      _
    $region7: #{gin_forward.1} parent=1 // pred_check_branch
      %27 = sbr.rel (0) target = $region9
    $region8: #{gin_forward.1} parent=1 // pred_region
      _
    $region9: #{gin_forward.1} parent=1 // pred_fallthru
      _
    // Predicated region
    $region10: #{gin_forward.1} parent=1 // pred_check
      _
    $region11: #{gin_forward.1} parent=1 // pred_check_branch
      %29 = sbr.rel (0) target = $region13
    $region12: #{gin_forward.1} parent=1 // pred_region
      _
    $region13: #{gin_forward.1} parent=1 // pred_fallthru
      _
    // Predicated region
    $region14: #{gin_forward.1} parent=1 // pred_check
      _
    $region15: #{gin_forward.1} parent=1 // pred_check_branch
      %31 = sbr.rel (0) target = $region17
    $region16: #{gin_forward.1} parent=1 // pred_region
      _
    $region17: #{gin_forward.1} parent=1 // pred_fallthru
      _
    // Predicated region
    $region18: #{gin_forward.1} parent=1 // pred_check
      _
    $region19: #{gin_forward.1} parent=1 // pred_check_branch
      %33 = sbr.rel (0) target = $region21
    $region20: #{gin_forward.1} parent=1 // pred_region
      _
    $region21: #{gin_forward.1} parent=1 // pred_fallthru
      _
    // Predicated region
    $region22: #{gin_forward.1} parent=1 // pred_check
      _
    $region23: #{gin_forward.1} parent=1 // pred_check_branch
      %35 = sbr.rel (0) target = $region25
    $region24: #{gin_forward.1} parent=1 // pred_region
      _
    $region25: #{gin_forward.1} parent=1 // pred_fallthru
      _
    // Predicated region
    $region26: #{gin_forward.1} parent=1 // pred_check
      _
    $region27: #{gin_forward.1} parent=1 // pred_check_branch
      %37 = sbr.rel (0) target = $region29
    $region28: #{gin_forward.1} parent=1 // pred_region
      _
    $region29: #{gin_forward.1} parent=1 // pred_fallthru
      _
    // Predicated region
    $region30: #{gin_forward.1} parent=1 // pred_check
      _
    $region31: #{gin_forward.1} parent=1 // pred_check_branch
      %39 = sbr.rel (0) target = $region33
    $region32: #{gin_forward.1} parent=1 // pred_region
      _
    $region33: #{gin_forward.1} parent=1 // pred_fallthru
      _
    // Predicated region
    $region34: #{gin_forward.1} parent=1 // pred_check
      _
    $region35: #{gin_forward.1} parent=1 // pred_check_branch
      %41 = sbr.rel (0) target = $region37
    $region36: #{gin_forward.1} parent=1 // pred_region
      %42 = dma.done [#allocation4], 2048
    $region37: #{gin_forward.1} parent=1 // pred_fallthru
      _
    %p43 = scmp.eq.s32.totalorder 0, 0
    // Predicated region
    $region38: #{gin_forward.1} parent=1 // pred_check
      %p44 = pneg %p43
    $region39: #{gin_forward.1} parent=1 // pred_check_branch
      %46 = sbr.rel (%p44) target = $region41
    $region40: #{gin_forward.1} parent=1 // pred_region
      %47 = vst [vmem:[#allocation2] sm:$0xff] 0.0
      %48 = vst [vmem:[#allocation2 + $0x8] sm:$0xff] 0.0
      %49 = vst [vmem:[#allocation2 + $0x10] sm:$0xff] 0.0
      %50 = vst [vmem:[#allocation2 + $0x18] sm:$0xff] 0.0
      %51 = vst [vmem:[#allocation2 + $0x20] sm:$0xff] 0.0
      %52 = vst [vmem:[#allocation2 + $0x28] sm:$0xff] 0.0
      %53 = vst [vmem:[#allocation2 + $0x30] sm:$0xff] 0.0
      %54 = vst [vmem:[#allocation2 + $0x38] sm:$0xff] 0.0
      %55 = vst [vmem:[#allocation2 + $0x40] sm:$0xff] 0.0
      %56 = vst [vmem:[#allocation2 + $0x48] sm:$0xff] 0.0
      %57 = vst [vmem:[#allocation2 + $0x50] sm:$0xff] 0.0
      %58 = vst [vmem:[#allocation2 + $0x58] sm:$0xff] 0.0
      %59 = vst [vmem:[#allocation2 + $0x60] sm:$0xff] 0.0
      %60 = vst [vmem:[#allocation2 + $0x68] sm:$0xff] 0.0
      %61 = vst [vmem:[#allocation2 + $0x70] sm:$0xff] 0.0
      %62 = vst [vmem:[#allocation2 + $0x78] sm:$0xff] 0.0
    $region41: #{gin_forward.1} parent=1 // pred_fallthru
      _
    %v63 = vld [vmem:[#allocation2] sm:$0xff]
    %v64 = vld [vmem:[#allocation2 + $0x8] sm:$0xff]
    %v65 = vld [vmem:[#allocation2 + $0x10] sm:$0xff]
    %v66 = vld [vmem:[#allocation2 + $0x18] sm:$0xff]
    %v67 = vld [vmem:[#allocation2 + $0x20] sm:$0xff]
    %v68 = vld [vmem:[#allocation2 + $0x28] sm:$0xff]
    %v69 = vld [vmem:[#allocation2 + $0x30] sm:$0xff]
    %v70 = vld [vmem:[#allocation2 + $0x38] sm:$0xff]
    %v71 = vld [vmem:[#allocation2 + $0x40] sm:$0xff]
    %v72 = vld [vmem:[#allocation2 + $0x48] sm:$0xff]
    %v73 = vld [vmem:[#allocation2 + $0x50] sm:$0xff]
    %v74 = vld [vmem:[#allocation2 + $0x58] sm:$0xff]
    %v75 = vld [vmem:[#allocation2 + $0x60] sm:$0xff]
    %v76 = vld [vmem:[#allocation2 + $0x68] sm:$0xff]
    %v77 = vld [vmem:[#allocation2 + $0x70] sm:$0xff]
    %v78 = vld [vmem:[#allocation2 + $0x78] sm:$0xff]
    %v79 = vld [vmem:[#allocation3] sm:$0xff]
    %v80 = vld [vmem:[#allocation3 + $0x8] sm:$0xff]
    %v81 = vld [vmem:[#allocation3 + $0x10] sm:$0xff]
    %v82 = vld [vmem:[#allocation3 + $0x18] sm:$0xff]
    %v83 = vld [vmem:[#allocation3 + $0x20] sm:$0xff]
    %v84 = vld [vmem:[#allocation3 + $0x28] sm:$0xff]
    %v85 = vld [vmem:[#allocation3 + $0x30] sm:$0xff]
    %v86 = vld [vmem:[#allocation3 + $0x38] sm:$0xff]
    %v87 = vld [vmem:[#allocation3 + $0x40] sm:$0xff]
    %v88 = vld [vmem:[#allocation3 + $0x48] sm:$0xff]
    %v89 = vld [vmem:[#allocation3 + $0x50] sm:$0xff]
    %v90 = vld [vmem:[#allocation3 + $0x58] sm:$0xff]
    %v91 = vld [vmem:[#allocation3 + $0x60] sm:$0xff]
    %v92 = vld [vmem:[#allocation3 + $0x68] sm:$0xff]
    %v93 = vld [vmem:[#allocation3 + $0x70] sm:$0xff]
    %v94 = vld [vmem:[#allocation3 + $0x78] sm:$0xff]
    %v95 = vld [vmem:[%s1] sm:$0xff]
    %v96 = vld [vmem:[%s1 + $0x8] sm:$0xff]
    %v97 = vld [vmem:[%s1 + $0x10] sm:$0xff]
    %v98 = vld [vmem:[%s1 + $0x18] sm:$0xff]
    %v99 = vld [vmem:[%s1 + $0x20] sm:$0xff]
    %v100 = vld [vmem:[%s1 + $0x28] sm:$0xff]
    %v101 = vld [vmem:[%s1 + $0x30] sm:$0xff]
    %v102 = vld [vmem:[%s1 + $0x38] sm:$0xff]
    %v103 = vld [vmem:[%s1 + $0x40] sm:$0xff]
    %v104 = vld [vmem:[%s1 + $0x48] sm:$0xff]
    %v105 = vld [vmem:[%s1 + $0x50] sm:$0xff]
    %v106 = vld [vmem:[%s1 + $0x58] sm:$0xff]
    %v107 = vld [vmem:[%s1 + $0x60] sm:$0xff]
    %v108 = vld [vmem:[%s1 + $0x68] sm:$0xff]
    %v109 = vld [vmem:[%s1 + $0x70] sm:$0xff]
    %v110 = vld [vmem:[%s1 + $0x78] sm:$0xff]
    %111 = vmatprep.subr.mxu0 0.0
    %112 = vmatpush1.msra.mxu0 %v95
    %113 = vmatprep.subr.mxu0 0.0
    %114 = vmatpush1.msra.mxu0 %v96
    %115 = vmatprep.subr.mxu0 0.0
    %116 = vmatpush1.msra.mxu0 %v97
    %117 = vmatprep.subr.mxu0 0.0
    %118 = vmatpush1.msra.mxu0 %v98
    %119 = vmatprep.subr.mxu0 0.0
    %120 = vmatpush1.msra.mxu0 %v99
    %121 = vmatprep.subr.mxu0 0.0
    %122 = vmatpush1.msra.mxu0 %v100
    %123 = vmatprep.subr.mxu0 0.0
    %124 = vmatpush1.msra.mxu0 %v101
    %125 = vmatprep.subr.mxu0 0.0
    %126 = vmatpush1.msra.mxu0 %v102
    %127 = vmatprep.subr.mxu0 0.0
    %128 = vmatpush1.msra.mxu0 %v103
    %129 = vmatprep.subr.mxu0 0.0
    %130 = vmatpush1.msra.mxu0 %v104
    %131 = vmatprep.subr.mxu0 0.0
    %132 = vmatpush1.msra.mxu0 %v105
    %133 = vmatprep.subr.mxu0 0.0
    %134 = vmatpush1.msra.mxu0 %v106
    %135 = vmatprep.subr.mxu0 0.0
    %136 = vmatpush1.msra.mxu0 %v107
    %137 = vmatprep.subr.mxu0 0.0
    %138 = vmatpush1.msra.mxu0 %v108
    %139 = vmatprep.subr.mxu0 0.0
    %140 = vmatpush1.msra.mxu0 %v109
    %141 = vmatprep.subr.mxu0 0.0
    %142 = vmatpush1.msra.mxu0 %v110
    %143 = vmatprep.subr.mxu0 0.0
    %144 = vmatpush1.msra.mxu0 0.0
    %145 = vmatprep.subr.mxu0 0.0
    %146 = vmatpush1.msra.mxu0 0.0
    %147 = vmatprep.subr.mxu0 0.0
    %148 = vmatpush1.msra.mxu0 0.0
    %149 = vmatprep.subr.mxu0 0.0
    %150 = vmatpush1.msra.mxu0 0.0
    %151 = vmatprep.subr.mxu0 0.0
    %152 = vmatpush1.msra.mxu0 0.0
    %153 = vmatprep.subr.mxu0 0.0
    %154 = vmatpush1.msra.mxu0 0.0
    %155 = vmatprep.subr.mxu0 0.0
    %156 = vmatpush1.msra.mxu0 0.0
    %157 = vmatprep.subr.mxu0 0.0
    %158 = vmatpush1.msra.mxu0 0.0
    %159 = vmatprep.subr.mxu0 0.0
    %160 = vmatpush1.msra.mxu0 0.0
    %161 = vmatprep.subr.mxu0 0.0
    %162 = vmatpush1.msra.mxu0 0.0
    %163 = vmatprep.subr.mxu0 0.0
    %164 = vmatpush1.msra.mxu0 0.0
    %165 = vmatprep.subr.mxu0 0.0
    %166 = vmatpush1.msra.mxu0 0.0
    %167 = vmatprep.subr.mxu0 0.0
    %168 = vmatpush1.msra.mxu0 0.0
    %169 = vmatprep.subr.mxu0 0.0
    %170 = vmatpush1.msra.mxu0 0.0
    %171 = vmatprep.subr.mxu0 0.0
    %172 = vmatpush1.msra.mxu0 0.0
    %173 = vmatprep.subr.mxu0 0.0
    %174 = vmatpush1.msra.mxu0 0.0
    %175 = vmatprep.mubr.f32.mxu0 0.0
    %176 = vmatmul.mubr.f32.gmra.mrb[0].mxu0 %v79
    %v177 = vpop.f32.mrb[0].mxu0
    %v178 = vadd.f32 0.0, %v177
    %v179 = vpop.f32.mrb[0].mxu0
    %180 = vmatprep.mubr.f32.mxu0 0.0
    %181 = vmatmul.mubr.f32.gmra.mrb[0].mxu0 %v80
    %v182 = vpop.f32.mrb[0].mxu0
    %v183 = vadd.f32 0.0, %v182
    %v184 = vpop.f32.mrb[0].mxu0
    %185 = vmatprep.mubr.f32.mxu0 0.0
    %186 = vmatmul.mubr.f32.gmra.mrb[0].mxu0 %v81
    %v187 = vpop.f32.mrb[0].mxu0
    %v188 = vadd.f32 0.0, %v187
    %v189 = vpop.f32.mrb[0].mxu0
    %190 = vmatprep.mubr.f32.mxu0 0.0
    %191 = vmatmul.mubr.f32.gmra.mrb[0].mxu0 %v82
    %v192 = vpop.f32.mrb[0].mxu0
    %v193 = vadd.f32 0.0, %v192
    %v194 = vpop.f32.mrb[0].mxu0
    %195 = vmatprep.mubr.f32.mxu0 0.0
    %196 = vmatmul.mubr.f32.gmra.mrb[0].mxu0 %v83
    %v197 = vpop.f32.mrb[0].mxu0
    %v198 = vadd.f32 0.0, %v197
    %v199 = vpop.f32.mrb[0].mxu0
    %200 = vmatprep.mubr.f32.mxu0 0.0
    %201 = vmatmul.mubr.f32.gmra.mrb[0].mxu0 %v84
    %v202 = vpop.f32.mrb[0].mxu0
    %v203 = vadd.f32 0.0, %v202
    %v204 = vpop.f32.mrb[0].mxu0
    %205 = vmatprep.mubr.f32.mxu0 0.0
    %206 = vmatmul.mubr.f32.gmra.mrb[0].mxu0 %v85
    %v207 = vpop.f32.mrb[0].mxu0
    %v208 = vadd.f32 0.0, %v207
    %v209 = vpop.f32.mrb[0].mxu0
    %210 = vmatprep.mubr.f32.mxu0 0.0
    %211 = vmatmul.mubr.f32.gmra.mrb[0].mxu0 %v86
    %v212 = vpop.f32.mrb[0].mxu0
    %v213 = vadd.f32 0.0, %v212
    %v214 = vpop.f32.mrb[0].mxu0
    %215 = vmatprep.mubr.f32.mxu0 0.0
    %216 = vmatmul.mubr.f32.gmra.mrb[0].mxu0 %v87
    %v217 = vpop.f32.mrb[0].mxu0
    %v218 = vadd.f32 0.0, %v217
    %v219 = vpop.f32.mrb[0].mxu0
    %220 = vmatprep.mubr.f32.mxu0 0.0
    %221 = vmatmul.mubr.f32.gmra.mrb[0].mxu0 %v88
    %v222 = vpop.f32.mrb[0].mxu0
    %v223 = vadd.f32 0.0, %v222
    %v224 = vpop.f32.mrb[0].mxu0
    %225 = vmatprep.mubr.f32.mxu0 0.0
    %226 = vmatmul.mubr.f32.gmra.mrb[0].mxu0 %v89
    %v227 = vpop.f32.mrb[0].mxu0
    %v228 = vadd.f32 0.0, %v227
    %v229 = vpop.f32.mrb[0].mxu0
    %230 = vmatprep.mubr.f32.mxu0 0.0
    %231 = vmatmul.mubr.f32.gmra.mrb[0].mxu0 %v90
    %v232 = vpop.f32.mrb[0].mxu0
    %v233 = vadd.f32 0.0, %v232
    %v234 = vpop.f32.mrb[0].mxu0
    %235 = vmatprep.mubr.f32.mxu0 0.0
    %236 = vmatmul.mubr.f32.gmra.mrb[0].mxu0 %v91
    %v237 = vpop.f32.mrb[0].mxu0
    %v238 = vadd.f32 0.0, %v237
    %v239 = vpop.f32.mrb[0].mxu0
    %240 = vmatprep.mubr.f32.mxu0 0.0
    %241 = vmatmul.mubr.f32.gmra.mrb[0].mxu0 %v92
    %v242 = vpop.f32.mrb[0].mxu0
    %v243 = vadd.f32 0.0, %v242
    %v244 = vpop.f32.mrb[0].mxu0
    %245 = vmatprep.mubr.f32.mxu0 0.0
    %246 = vmatmul.mubr.f32.gmra.mrb[0].mxu0 %v93
    %v247 = vpop.f32.mrb[0].mxu0
    %v248 = vadd.f32 0.0, %v247
    %v249 = vpop.f32.mrb[0].mxu0
    %250 = vmatprep.mubr.f32.mxu0 0.0
    %251 = vmatmul.mubr.f32.gmra.mrb[0].mxu0 %v94
    %v252 = vpop.f32.mrb[0].mxu0
    %v253 = vadd.f32 0.0, %v252
    %v254 = vpop.f32.mrb[0].mxu0
    %255 = vdwg.mxu0
    %v256 = vadd.f32 %v63, %v178
    %v257 = vadd.f32 %v64, %v183
    %v258 = vadd.f32 %v65, %v188
    %v259 = vadd.f32 %v66, %v193
    %v260 = vadd.f32 %v67, %v198
    %v261 = vadd.f32 %v68, %v203
    %v262 = vadd.f32 %v69, %v208
    %v263 = vadd.f32 %v70, %v213
    %v264 = vadd.f32 %v71, %v218
    %v265 = vadd.f32 %v72, %v223
    %v266 = vadd.f32 %v73, %v228
    %v267 = vadd.f32 %v74, %v233
    %v268 = vadd.f32 %v75, %v238
    %v269 = vadd.f32 %v76, %v243
    %v270 = vadd.f32 %v77, %v248
    %v271 = vadd.f32 %v78, %v253
    %272 = vst [vmem:[#allocation2] sm:$0xff] %v256
    %273 = vst [vmem:[#allocation2 + $0x8] sm:$0xff] %v257
    %274 = vst [vmem:[#allocation2 + $0x10] sm:$0xff] %v258
    %275 = vst [vmem:[#allocation2 + $0x18] sm:$0xff] %v259
    %276 = vst [vmem:[#allocation2 + $0x20] sm:$0xff] %v260
    %277 = vst [vmem:[#allocation2 + $0x28] sm:$0xff] %v261
    %278 = vst [vmem:[#allocation2 + $0x30] sm:$0xff] %v262
    %279 = vst [vmem:[#allocation2 + $0x38] sm:$0xff] %v263
    %280 = vst [vmem:[#allocation2 + $0x40] sm:$0xff] %v264
    %281 = vst [vmem:[#allocation2 + $0x48] sm:$0xff] %v265
    %282 = vst [vmem:[#allocation2 + $0x50] sm:$0xff] %v266
    %283 = vst [vmem:[#allocation2 + $0x58] sm:$0xff] %v267
    %284 = vst [vmem:[#allocation2 + $0x60] sm:$0xff] %v268
    %285 = vst [vmem:[#allocation2 + $0x68] sm:$0xff] %v269
    %286 = vst [vmem:[#allocation2 + $0x70] sm:$0xff] %v270
    %287 = vst [vmem:[#allocation2 + $0x78] sm:$0xff] %v271
    // Predicated region
    $region42: #{gin_forward.1} parent=1 // pred_check
      %p288 = pneg %p43
    $region43: #{gin_forward.1} parent=1 // pred_check_branch
      %290 = sbr.rel (%p288) target = $region45
    $region44: #{gin_forward.1} parent=1 // pred_region
      %v291 = vld [vmem:[#allocation2] sm:$0xff]
      %v292 = vld [vmem:[#allocation2 + $0x8] sm:$0xff]
      %v293 = vld [vmem:[#allocation2 + $0x10] sm:$0xff]
      %v294 = vld [vmem:[#allocation2 + $0x18] sm:$0xff]
      %v295 = vld [vmem:[#allocation2 + $0x20] sm:$0xff]
      %v296 = vld [vmem:[#allocation2 + $0x28] sm:$0xff]
      %v297 = vld [vmem:[#allocation2 + $0x30] sm:$0xff]
      %v298 = vld [vmem:[#allocation2 + $0x38] sm:$0xff]
      %v299 = vld [vmem:[#allocation2 + $0x40] sm:$0xff]
      %v300 = vld [vmem:[#allocation2 + $0x48] sm:$0xff]
      %v301 = vld [vmem:[#allocation2 + $0x50] sm:$0xff]
      %v302 = vld [vmem:[#allocation2 + $0x58] sm:$0xff]
      %v303 = vld [vmem:[#allocation2 + $0x60] sm:$0xff]
      %v304 = vld [vmem:[#allocation2 + $0x68] sm:$0xff]
      %v305 = vld [vmem:[#allocation2 + $0x70] sm:$0xff]
      %v306 = vld [vmem:[#allocation2 + $0x78] sm:$0xff]
      %v307 = vld [vmem:[%s2] sm:$0xff]
      %v308 = vld [vmem:[%s2 + $0x8] sm:$0xff]
      %v309 = vld [vmem:[%s2 + $0x10] sm:$0xff]
      %v310 = vld [vmem:[%s2 + $0x18] sm:$0xff]
      %v311 = vld [vmem:[%s2 + $0x20] sm:$0xff]
      %v312 = vld [vmem:[%s2 + $0x28] sm:$0xff]
      %v313 = vld [vmem:[%s2 + $0x30] sm:$0xff]
      %v314 = vld [vmem:[%s2 + $0x38] sm:$0xff]
      %v315 = vld [vmem:[%s2 + $0x40] sm:$0xff]
      %v316 = vld [vmem:[%s2 + $0x48] sm:$0xff]
      %v317 = vld [vmem:[%s2 + $0x50] sm:$0xff]
      %v318 = vld [vmem:[%s2 + $0x58] sm:$0xff]
      %v319 = vld [vmem:[%s2 + $0x60] sm:$0xff]
      %v320 = vld [vmem:[%s2 + $0x68] sm:$0xff]
      %v321 = vld [vmem:[%s2 + $0x70] sm:$0xff]
      %v322 = vld [vmem:[%s2 + $0x78] sm:$0xff]
      %v323 = vld [vmem:[%s3] sm:$0x1]
      %v325 = vlaneseq
      %v326 = vshrl.u32 %v325, 7
      %v327 = vsub.s32 0, %v326
      %v328 = vrot.slane %v323, %v327
      %330 = vmatprep.subr.mxu0 0.0
      %331 = vmatpush1.msra.mxu0 %v307
      %332 = vmatprep.subr.mxu0 0.0
      %333 = vmatpush1.msra.mxu0 %v308
      %334 = vmatprep.subr.mxu0 0.0
      %335 = vmatpush1.msra.mxu0 %v309
      %336 = vmatprep.subr.mxu0 0.0
      %337 = vmatpush1.msra.mxu0 %v310
      %338 = vmatprep.subr.mxu0 0.0
      %339 = vmatpush1.msra.mxu0 %v311
      %340 = vmatprep.subr.mxu0 0.0
      %341 = vmatpush1.msra.mxu0 %v312
      %342 = vmatprep.subr.mxu0 0.0
      %343 = vmatpush1.msra.mxu0 %v313
      %344 = vmatprep.subr.mxu0 0.0
      %345 = vmatpush1.msra.mxu0 %v314
      %346 = vmatprep.subr.mxu0 0.0
      %347 = vmatpush1.msra.mxu0 %v315
      %348 = vmatprep.subr.mxu0 0.0
      %349 = vmatpush1.msra.mxu0 %v316
      %350 = vmatprep.subr.mxu0 0.0
      %351 = vmatpush1.msra.mxu0 %v317
      %352 = vmatprep.subr.mxu0 0.0
      %353 = vmatpush1.msra.mxu0 %v318
      %354 = vmatprep.subr.mxu0 0.0
      %355 = vmatpush1.msra.mxu0 %v319
      %356 = vmatprep.subr.mxu0 0.0
      %357 = vmatpush1.msra.mxu0 %v320
      %358 = vmatprep.subr.mxu0 0.0
      %359 = vmatpush1.msra.mxu0 %v321
      %360 = vmatprep.subr.mxu0 0.0
      %361 = vmatpush1.msra.mxu0 %v322
      %362 = vmatprep.subr.mxu0 0.0
      %363 = vmatpush1.msra.mxu0 0.0
      %364 = vmatprep.subr.mxu0 0.0
      %365 = vmatpush1.msra.mxu0 0.0
      %366 = vmatprep.subr.mxu0 0.0
      %367 = vmatpush1.msra.mxu0 0.0
      %368 = vmatprep.subr.mxu0 0.0
      %369 = vmatpush1.msra.mxu0 0.0
      %370 = vmatprep.subr.mxu0 0.0
      %371 = vmatpush1.msra.mxu0 0.0
      %372 = vmatprep.subr.mxu0 0.0
      %373 = vmatpush1.msra.mxu0 0.0
      %374 = vmatprep.subr.mxu0 0.0
      %375 = vmatpush1.msra.mxu0 0.0
      %376 = vmatprep.subr.mxu0 0.0
      %377 = vmatpush1.msra.mxu0 0.0
      %378 = vmatprep.subr.mxu0 0.0
      %379 = vmatpush1.msra.mxu0 0.0
      %380 = vmatprep.subr.mxu0 0.0
      %381 = vmatpush1.msra.mxu0 0.0
      %382 = vmatprep.subr.mxu0 0.0
      %383 = vmatpush1.msra.mxu0 0.0
      %384 = vmatprep.subr.mxu0 0.0
      %385 = vmatpush1.msra.mxu0 0.0
      %386 = vmatprep.subr.mxu0 0.0
      %387 = vmatpush1.msra.mxu0 0.0
      %388 = vmatprep.subr.mxu0 0.0
      %389 = vmatpush1.msra.mxu0 0.0
      %390 = vmatprep.subr.mxu0 0.0
      %391 = vmatpush1.msra.mxu0 0.0
      %392 = vmatprep.subr.mxu0 0.0
      %393 = vmatpush1.msra.mxu0 0.0
      %394 = vmatprep.mubr.f32.mxu0 0.0
      %395 = vmatmul.mubr.f32.gmra.mrb[0].mxu0 %v291
      %v396 = vpop.f32.mrb[0].mxu0
      %v397 = vadd.f32 %v328, %v396
      %v398 = vpop.f32.mrb[0].mxu0
      %399 = vmatprep.mubr.f32.mxu0 0.0
      %400 = vmatmul.mubr.f32.gmra.mrb[0].mxu0 %v292
      %v401 = vpop.f32.mrb[0].mxu0
      %v402 = vadd.f32 %v328, %v401
      %v403 = vpop.f32.mrb[0].mxu0
      %404 = vmatprep.mubr.f32.mxu0 0.0
      %405 = vmatmul.mubr.f32.gmra.mrb[0].mxu0 %v293
      %v406 = vpop.f32.mrb[0].mxu0
      %v407 = vadd.f32 %v328, %v406
      %v408 = vpop.f32.mrb[0].mxu0
      %409 = vmatprep.mubr.f32.mxu0 0.0
      %410 = vmatmul.mubr.f32.gmra.mrb[0].mxu0 %v294
      %v411 = vpop.f32.mrb[0].mxu0
      %v412 = vadd.f32 %v328, %v411
      %v413 = vpop.f32.mrb[0].mxu0
      %414 = vmatprep.mubr.f32.mxu0 0.0
      %415 = vmatmul.mubr.f32.gmra.mrb[0].mxu0 %v295
      %v416 = vpop.f32.mrb[0].mxu0
      %v417 = vadd.f32 %v328, %v416
      %v418 = vpop.f32.mrb[0].mxu0
      %419 = vmatprep.mubr.f32.mxu0 0.0
      %420 = vmatmul.mubr.f32.gmra.mrb[0].mxu0 %v296
      %v421 = vpop.f32.mrb[0].mxu0
      %v422 = vadd.f32 %v328, %v421
      %v423 = vpop.f32.mrb[0].mxu0
      %424 = vmatprep.mubr.f32.mxu0 0.0
      %425 = vmatmul.mubr.f32.gmra.mrb[0].mxu0 %v297
      %v426 = vpop.f32.mrb[0].mxu0
      %v427 = vadd.f32 %v328, %v426
      %v428 = vpop.f32.mrb[0].mxu0
      %429 = vmatprep.mubr.f32.mxu0 0.0
      %430 = vmatmul.mubr.f32.gmra.mrb[0].mxu0 %v298
      %v431 = vpop.f32.mrb[0].mxu0
      %v432 = vadd.f32 %v328, %v431
      %v433 = vpop.f32.mrb[0].mxu0
      %434 = vmatprep.mubr.f32.mxu0 0.0
      %435 = vmatmul.mubr.f32.gmra.mrb[0].mxu0 %v299
      %v436 = vpop.f32.mrb[0].mxu0
      %v437 = vadd.f32 %v328, %v436
      %v438 = vpop.f32.mrb[0].mxu0
      %439 = vmatprep.mubr.f32.mxu0 0.0
      %440 = vmatmul.mubr.f32.gmra.mrb[0].mxu0 %v300
      %v441 = vpop.f32.mrb[0].mxu0
      %v442 = vadd.f32 %v328, %v441
      %v443 = vpop.f32.mrb[0].mxu0
      %444 = vmatprep.mubr.f32.mxu0 0.0
      %445 = vmatmul.mubr.f32.gmra.mrb[0].mxu0 %v301
      %v446 = vpop.f32.mrb[0].mxu0
      %v447 = vadd.f32 %v328, %v446
      %v448 = vpop.f32.mrb[0].mxu0
      %449 = vmatprep.mubr.f32.mxu0 0.0
      %450 = vmatmul.mubr.f32.gmra.mrb[0].mxu0 %v302
      %v451 = vpop.f32.mrb[0].mxu0
      %v452 = vadd.f32 %v328, %v451
      %v453 = vpop.f32.mrb[0].mxu0
      %454 = vmatprep.mubr.f32.mxu0 0.0
      %455 = vmatmul.mubr.f32.gmra.mrb[0].mxu0 %v303
      %v456 = vpop.f32.mrb[0].mxu0
      %v457 = vadd.f32 %v328, %v456
      %v458 = vpop.f32.mrb[0].mxu0
      %459 = vmatprep.mubr.f32.mxu0 0.0
      %460 = vmatmul.mubr.f32.gmra.mrb[0].mxu0 %v304
      %v461 = vpop.f32.mrb[0].mxu0
      %v462 = vadd.f32 %v328, %v461
      %v463 = vpop.f32.mrb[0].mxu0
      %464 = vmatprep.mubr.f32.mxu0 0.0
      %465 = vmatmul.mubr.f32.gmra.mrb[0].mxu0 %v305
      %v466 = vpop.f32.mrb[0].mxu0
      %v467 = vadd.f32 %v328, %v466
      %v468 = vpop.f32.mrb[0].mxu0
      %469 = vmatprep.mubr.f32.mxu0 0.0
      %470 = vmatmul.mubr.f32.gmra.mrb[0].mxu0 %v306
      %v471 = vpop.f32.mrb[0].mxu0
      %v472 = vadd.f32 %v328, %v471
      %v473 = vpop.f32.mrb[0].mxu0
      %474 = vdwg.mxu0
      %v475 = vmax.f32 %v397, 0.0
      %v476 = vmax.f32 %v402, 0.0
      %v477 = vmax.f32 %v407, 0.0
      %v478 = vmax.f32 %v412, 0.0
      %v479 = vmax.f32 %v417, 0.0
      %v480 = vmax.f32 %v422, 0.0
      %v481 = vmax.f32 %v427, 0.0
      %v482 = vmax.f32 %v432, 0.0
      %v483 = vmax.f32 %v437, 0.0
      %v484 = vmax.f32 %v442, 0.0
      %v485 = vmax.f32 %v447, 0.0
      %v486 = vmax.f32 %v452, 0.0
      %v487 = vmax.f32 %v457, 0.0
      %v488 = vmax.f32 %v462, 0.0
      %v489 = vmax.f32 %v467, 0.0
      %v490 = vmax.f32 %v472, 0.0
      %v491 = vld [vmem:[%s4] sm:$0xff]
      %v492 = vld [vmem:[%s4 + $0x8] sm:$0xff]
      %v493 = vld [vmem:[%s4 + $0x10] sm:$0xff]
      %v494 = vld [vmem:[%s4 + $0x18] sm:$0xff]
      %v495 = vld [vmem:[%s4 + $0x20] sm:$0xff]
      %v496 = vld [vmem:[%s4 + $0x28] sm:$0xff]
      %v497 = vld [vmem:[%s4 + $0x30] sm:$0xff]
      %v498 = vld [vmem:[%s4 + $0x38] sm:$0xff]
      %v499 = vld [vmem:[%s4 + $0x40] sm:$0xff]
      %v500 = vld [vmem:[%s4 + $0x48] sm:$0xff]
      %v501 = vld [vmem:[%s4 + $0x50] sm:$0xff]
      %v502 = vld [vmem:[%s4 + $0x58] sm:$0xff]
      %v503 = vld [vmem:[%s4 + $0x60] sm:$0xff]
      %v504 = vld [vmem:[%s4 + $0x68] sm:$0xff]
      %v505 = vld [vmem:[%s4 + $0x70] sm:$0xff]
      %v506 = vld [vmem:[%s4 + $0x78] sm:$0xff]
      %v507 = vld [vmem:[%s5] sm:$0x1]
      %v509 = vlaneseq
      %v510 = vshrl.u32 %v509, 7
      %v511 = vsub.s32 0, %v510
      %v512 = vrot.slane %v507, %v511
      %514 = vmatprep.subr.mxu0 0.0
      %515 = vmatpush1.msra.mxu0 %v491
      %516 = vmatprep.subr.mxu0 0.0
      %517 = vmatpush1.msra.mxu0 %v492
      %518 = vmatprep.subr.mxu0 0.0
      %519 = vmatpush1.msra.mxu0 %v493
      %520 = vmatprep.subr.mxu0 0.0
      %521 = vmatpush1.msra.mxu0 %v494
      %522 = vmatprep.subr.mxu0 0.0
      %523 = vmatpush1.msra.mxu0 %v495
      %524 = vmatprep.subr.mxu0 0.0
      %525 = vmatpush1.msra.mxu0 %v496
      %526 = vmatprep.subr.mxu0 0.0
      %527 = vmatpush1.msra.mxu0 %v497
      %528 = vmatprep.subr.mxu0 0.0
      %529 = vmatpush1.msra.mxu0 %v498
      %530 = vmatprep.subr.mxu0 0.0
      %531 = vmatpush1.msra.mxu0 %v499
      %532 = vmatprep.subr.mxu0 0.0
      %533 = vmatpush1.msra.mxu0 %v500
      %534 = vmatprep.subr.mxu0 0.0
      %535 = vmatpush1.msra.mxu0 %v501
      %536 = vmatprep.subr.mxu0 0.0
      %537 = vmatpush1.msra.mxu0 %v502
      %538 = vmatprep.subr.mxu0 0.0
      %539 = vmatpush1.msra.mxu0 %v503
      %540 = vmatprep.subr.mxu0 0.0
      %541 = vmatpush1.msra.mxu0 %v504
      %542 = vmatprep.subr.mxu0 0.0
      %543 = vmatpush1.msra.mxu0 %v505
      %544 = vmatprep.subr.mxu0 0.0
      %545 = vmatpush1.msra.mxu0 %v506
      %546 = vmatprep.subr.mxu0 0.0
      %547 = vmatpush1.msra.mxu0 0.0
      %548 = vmatprep.subr.mxu0 0.0
      %549 = vmatpush1.msra.mxu0 0.0
      %550 = vmatprep.subr.mxu0 0.0
      %551 = vmatpush1.msra.mxu0 0.0
      %552 = vmatprep.subr.mxu0 0.0
      %553 = vmatpush1.msra.mxu0 0.0
      %554 = vmatprep.subr.mxu0 0.0
      %555 = vmatpush1.msra.mxu0 0.0
      %556 = vmatprep.subr.mxu0 0.0
      %557 = vmatpush1.msra.mxu0 0.0
      %558 = vmatprep.subr.mxu0 0.0
      %559 = vmatpush1.msra.mxu0 0.0
      %560 = vmatprep.subr.mxu0 0.0
      %561 = vmatpush1.msra.mxu0 0.0
      %562 = vmatprep.subr.mxu0 0.0
      %563 = vmatpush1.msra.mxu0 0.0
      %564 = vmatprep.subr.mxu0 0.0
      %565 = vmatpush1.msra.mxu0 0.0
      %566 = vmatprep.subr.mxu0 0.0
      %567 = vmatpush1.msra.mxu0 0.0
      %568 = vmatprep.subr.mxu0 0.0
      %569 = vmatpush1.msra.mxu0 0.0
      %570 = vmatprep.subr.mxu0 0.0
      %571 = vmatpush1.msra.mxu0 0.0
      %572 = vmatprep.subr.mxu0 0.0
      %573 = vmatpush1.msra.mxu0 0.0
      %574 = vmatprep.subr.mxu0 0.0
      %575 = vmatpush1.msra.mxu0 0.0
      %576 = vmatprep.subr.mxu0 0.0
      %577 = vmatpush1.msra.mxu0 0.0
      %578 = vmatprep.mubr.f32.mxu0 0.0
      %579 = vmatmul.mubr.f32.gmra.mrb[0].mxu0 %v475
      %v580 = vpop.f32.mrb[0].mxu0
      %v581 = vadd.f32 %v512, %v580
      %v582 = vpop.f32.mrb[0].mxu0
      %583 = vmatprep.mubr.f32.mxu0 0.0
      %584 = vmatmul.mubr.f32.gmra.mrb[0].mxu0 %v476
      %v585 = vpop.f32.mrb[0].mxu0
      %v586 = vadd.f32 %v512, %v585
      %v587 = vpop.f32.mrb[0].mxu0
      %588 = vmatprep.mubr.f32.mxu0 0.0
      %589 = vmatmul.mubr.f32.gmra.mrb[0].mxu0 %v477
      %v590 = vpop.f32.mrb[0].mxu0
      %v591 = vadd.f32 %v512, %v590
      %v592 = vpop.f32.mrb[0].mxu0
      %593 = vmatprep.mubr.f32.mxu0 0.0
      %594 = vmatmul.mubr.f32.gmra.mrb[0].mxu0 %v478
      %v595 = vpop.f32.mrb[0].mxu0
      %v596 = vadd.f32 %v512, %v595
      %v597 = vpop.f32.mrb[0].mxu0
      %598 = vmatprep.mubr.f32.mxu0 0.0
      %599 = vmatmul.mubr.f32.gmra.mrb[0].mxu0 %v479
      %v600 = vpop.f32.mrb[0].mxu0
      %v601 = vadd.f32 %v512, %v600
      %v602 = vpop.f32.mrb[0].mxu0
      %603 = vmatprep.mubr.f32.mxu0 0.0
      %604 = vmatmul.mubr.f32.gmra.mrb[0].mxu0 %v480
      %v605 = vpop.f32.mrb[0].mxu0
      %v606 = vadd.f32 %v512, %v605
      %v607 = vpop.f32.mrb[0].mxu0
      %608 = vmatprep.mubr.f32.mxu0 0.0
      %609 = vmatmul.mubr.f32.gmra.mrb[0].mxu0 %v481
      %v610 = vpop.f32.mrb[0].mxu0
      %v611 = vadd.f32 %v512, %v610
      %v612 = vpop.f32.mrb[0].mxu0
      %613 = vmatprep.mubr.f32.mxu0 0.0
      %614 = vmatmul.mubr.f32.gmra.mrb[0].mxu0 %v482
      %v615 = vpop.f32.mrb[0].mxu0
      %v616 = vadd.f32 %v512, %v615
      %v617 = vpop.f32.mrb[0].mxu0
      %618 = vmatprep.mubr.f32.mxu0 0.0
      %619 = vmatmul.mubr.f32.gmra.mrb[0].mxu0 %v483
      %v620 = vpop.f32.mrb[0].mxu0
      %v621 = vadd.f32 %v512, %v620
      %v622 = vpop.f32.mrb[0].mxu0
      %623 = vmatprep.mubr.f32.mxu0 0.0
      %624 = vmatmul.mubr.f32.gmra.mrb[0].mxu0 %v484
      %v625 = vpop.f32.mrb[0].mxu0
      %v626 = vadd.f32 %v512, %v625
      %v627 = vpop.f32.mrb[0].mxu0
      %628 = vmatprep.mubr.f32.mxu0 0.0
      %629 = vmatmul.mubr.f32.gmra.mrb[0].mxu0 %v485
      %v630 = vpop.f32.mrb[0].mxu0
      %v631 = vadd.f32 %v512, %v630
      %v632 = vpop.f32.mrb[0].mxu0
      %633 = vmatprep.mubr.f32.mxu0 0.0
      %634 = vmatmul.mubr.f32.gmra.mrb[0].mxu0 %v486
      %v635 = vpop.f32.mrb[0].mxu0
      %v636 = vadd.f32 %v512, %v635
      %v637 = vpop.f32.mrb[0].mxu0
      %638 = vmatprep.mubr.f32.mxu0 0.0
      %639 = vmatmul.mubr.f32.gmra.mrb[0].mxu0 %v487
      %v640 = vpop.f32.mrb[0].mxu0
      %v641 = vadd.f32 %v512, %v640
      %v642 = vpop.f32.mrb[0].mxu0
      %643 = vmatprep.mubr.f32.mxu0 0.0
      %644 = vmatmul.mubr.f32.gmra.mrb[0].mxu0 %v488
      %v645 = vpop.f32.mrb[0].mxu0
      %v646 = vadd.f32 %v512, %v645
      %v647 = vpop.f32.mrb[0].mxu0
      %648 = vmatprep.mubr.f32.mxu0 0.0
      %649 = vmatmul.mubr.f32.gmra.mrb[0].mxu0 %v489
      %v650 = vpop.f32.mrb[0].mxu0
      %v651 = vadd.f32 %v512, %v650
      %v652 = vpop.f32.mrb[0].mxu0
      %653 = vmatprep.mubr.f32.mxu0 0.0
      %654 = vmatmul.mubr.f32.gmra.mrb[0].mxu0 %v490
      %v655 = vpop.f32.mrb[0].mxu0
      %v656 = vadd.f32 %v512, %v655
      %v657 = vpop.f32.mrb[0].mxu0
      %658 = vdwg.mxu0
      %v659 = vmax.f32 %v581, 0.0
      %v660 = vmax.f32 %v586, 0.0
      %v661 = vmax.f32 %v591, 0.0
      %v662 = vmax.f32 %v596, 0.0
      %v663 = vmax.f32 %v601, 0.0
      %v664 = vmax.f32 %v606, 0.0
      %v665 = vmax.f32 %v611, 0.0
      %v666 = vmax.f32 %v616, 0.0
      %v667 = vmax.f32 %v621, 0.0
      %v668 = vmax.f32 %v626, 0.0
      %v669 = vmax.f32 %v631, 0.0
      %v670 = vmax.f32 %v636, 0.0
      %v671 = vmax.f32 %v641, 0.0
      %v672 = vmax.f32 %v646, 0.0
      %v673 = vmax.f32 %v651, 0.0
      %v674 = vmax.f32 %v656, 0.0
      %v675 = vld [vmem:[%s6] sm:$0xff]
      %v676 = vld [vmem:[%s6 + $0x8] sm:$0xff]
      %v677 = vld [vmem:[%s6 + $0x10] sm:$0xff]
      %v678 = vld [vmem:[%s6 + $0x18] sm:$0xff]
      %v679 = vld [vmem:[%s6 + $0x20] sm:$0xff]
      %v680 = vld [vmem:[%s6 + $0x28] sm:$0xff]
      %v681 = vld [vmem:[%s6 + $0x30] sm:$0xff]
      %v682 = vld [vmem:[%s6 + $0x38] sm:$0xff]
      %v683 = vld [vmem:[%s6 + $0x40] sm:$0xff]
      %v684 = vld [vmem:[%s6 + $0x48] sm:$0xff]
      %v685 = vld [vmem:[%s6 + $0x50] sm:$0xff]
      %v686 = vld [vmem:[%s6 + $0x58] sm:$0xff]
      %v687 = vld [vmem:[%s6 + $0x60] sm:$0xff]
      %v688 = vld [vmem:[%s6 + $0x68] sm:$0xff]
      %v689 = vld [vmem:[%s6 + $0x70] sm:$0xff]
      %v690 = vld [vmem:[%s6 + $0x78] sm:$0xff]
      %v691 = vld [vmem:[%s7] sm:$0x1]
      %v693 = vlaneseq
      %v694 = vshrl.u32 %v693, 7
      %v695 = vsub.s32 0, %v694
      %v696 = vrot.slane %v691, %v695
      %698 = vmatprep.subr.mxu0 0.0
      %699 = vmatpush1.msra.mxu0 %v675
      %700 = vmatprep.subr.mxu0 0.0
      %701 = vmatpush1.msra.mxu0 %v676
      %702 = vmatprep.subr.mxu0 0.0
      %703 = vmatpush1.msra.mxu0 %v677
      %704 = vmatprep.subr.mxu0 0.0
      %705 = vmatpush1.msra.mxu0 %v678
      %706 = vmatprep.subr.mxu0 0.0
      %707 = vmatpush1.msra.mxu0 %v679
      %708 = vmatprep.subr.mxu0 0.0
      %709 = vmatpush1.msra.mxu0 %v680
      %710 = vmatprep.subr.mxu0 0.0
      %711 = vmatpush1.msra.mxu0 %v681
      %712 = vmatprep.subr.mxu0 0.0
      %713 = vmatpush1.msra.mxu0 %v682
      %714 = vmatprep.subr.mxu0 0.0
      %715 = vmatpush1.msra.mxu0 %v683
      %716 = vmatprep.subr.mxu0 0.0
      %717 = vmatpush1.msra.mxu0 %v684
      %718 = vmatprep.subr.mxu0 0.0
      %719 = vmatpush1.msra.mxu0 %v685
      %720 = vmatprep.subr.mxu0 0.0
      %721 = vmatpush1.msra.mxu0 %v686
      %722 = vmatprep.subr.mxu0 0.0
      %723 = vmatpush1.msra.mxu0 %v687
      %724 = vmatprep.subr.mxu0 0.0
      %725 = vmatpush1.msra.mxu0 %v688
      %726 = vmatprep.subr.mxu0 0.0
      %727 = vmatpush1.msra.mxu0 %v689
      %728 = vmatprep.subr.mxu0 0.0
      %729 = vmatpush1.msra.mxu0 %v690
      %730 = vmatprep.subr.mxu0 0.0
      %731 = vmatpush1.msra.mxu0 0.0
      %732 = vmatprep.subr.mxu0 0.0
      %733 = vmatpush1.msra.mxu0 0.0
      %734 = vmatprep.subr.mxu0 0.0
      %735 = vmatpush1.msra.mxu0 0.0
      %736 = vmatprep.subr.mxu0 0.0
      %737 = vmatpush1.msra.mxu0 0.0
      %738 = vmatprep.subr.mxu0 0.0
      %739 = vmatpush1.msra.mxu0 0.0
      %740 = vmatprep.subr.mxu0 0.0
      %741 = vmatpush1.msra.mxu0 0.0
      %742 = vmatprep.subr.mxu0 0.0
      %743 = vmatpush1.msra.mxu0 0.0
      %744 = vmatprep.subr.mxu0 0.0
      %745 = vmatpush1.msra.mxu0 0.0
      %746 = vmatprep.subr.mxu0 0.0
      %747 = vmatpush1.msra.mxu0 0.0
      %748 = vmatprep.subr.mxu0 0.0
      %749 = vmatpush1.msra.mxu0 0.0
      %750 = vmatprep.subr.mxu0 0.0
      %751 = vmatpush1.msra.mxu0 0.0
      %752 = vmatprep.subr.mxu0 0.0
      %753 = vmatpush1.msra.mxu0 0.0
      %754 = vmatprep.subr.mxu0 0.0
      %755 = vmatpush1.msra.mxu0 0.0
      %756 = vmatprep.subr.mxu0 0.0
      %757 = vmatpush1.msra.mxu0 0.0
      %758 = vmatprep.subr.mxu0 0.0
      %759 = vmatpush1.msra.mxu0 0.0
      %760 = vmatprep.subr.mxu0 0.0
      %761 = vmatpush1.msra.mxu0 0.0
      %762 = vmatprep.mubr.f32.mxu0 0.0
      %763 = vmatmul.mubr.f32.gmra.mrb[0].mxu0 %v659
      %v764 = vpop.f32.mrb[0].mxu0
      %v765 = vadd.f32 %v696, %v764
      %v766 = vpop.f32.mrb[0].mxu0
      %767 = vmatprep.mubr.f32.mxu0 0.0
      %768 = vmatmul.mubr.f32.gmra.mrb[0].mxu0 %v660
      %v769 = vpop.f32.mrb[0].mxu0
      %v770 = vadd.f32 %v696, %v769
      %v771 = vpop.f32.mrb[0].mxu0
      %772 = vmatprep.mubr.f32.mxu0 0.0
      %773 = vmatmul.mubr.f32.gmra.mrb[0].mxu0 %v661
      %v774 = vpop.f32.mrb[0].mxu0
      %v775 = vadd.f32 %v696, %v774
      %v776 = vpop.f32.mrb[0].mxu0
      %777 = vmatprep.mubr.f32.mxu0 0.0
      %778 = vmatmul.mubr.f32.gmra.mrb[0].mxu0 %v662
      %v779 = vpop.f32.mrb[0].mxu0
      %v780 = vadd.f32 %v696, %v779
      %v781 = vpop.f32.mrb[0].mxu0
      %782 = vmatprep.mubr.f32.mxu0 0.0
      %783 = vmatmul.mubr.f32.gmra.mrb[0].mxu0 %v663
      %v784 = vpop.f32.mrb[0].mxu0
      %v785 = vadd.f32 %v696, %v784
      %v786 = vpop.f32.mrb[0].mxu0
      %787 = vmatprep.mubr.f32.mxu0 0.0
      %788 = vmatmul.mubr.f32.gmra.mrb[0].mxu0 %v664
      %v789 = vpop.f32.mrb[0].mxu0
      %v790 = vadd.f32 %v696, %v789
      %v791 = vpop.f32.mrb[0].mxu0
      %792 = vmatprep.mubr.f32.mxu0 0.0
      %793 = vmatmul.mubr.f32.gmra.mrb[0].mxu0 %v665
      %v794 = vpop.f32.mrb[0].mxu0
      %v795 = vadd.f32 %v696, %v794
      %v796 = vpop.f32.mrb[0].mxu0
      %797 = vmatprep.mubr.f32.mxu0 0.0
      %798 = vmatmul.mubr.f32.gmra.mrb[0].mxu0 %v666
      %v799 = vpop.f32.mrb[0].mxu0
      %v800 = vadd.f32 %v696, %v799
      %v801 = vpop.f32.mrb[0].mxu0
      %802 = vmatprep.mubr.f32.mxu0 0.0
      %803 = vmatmul.mubr.f32.gmra.mrb[0].mxu0 %v667
      %v804 = vpop.f32.mrb[0].mxu0
      %v805 = vadd.f32 %v696, %v804
      %v806 = vpop.f32.mrb[0].mxu0
      %807 = vmatprep.mubr.f32.mxu0 0.0
      %808 = vmatmul.mubr.f32.gmra.mrb[0].mxu0 %v668
      %v809 = vpop.f32.mrb[0].mxu0
      %v810 = vadd.f32 %v696, %v809
      %v811 = vpop.f32.mrb[0].mxu0
      %812 = vmatprep.mubr.f32.mxu0 0.0
      %813 = vmatmul.mubr.f32.gmra.mrb[0].mxu0 %v669
      %v814 = vpop.f32.mrb[0].mxu0
      %v815 = vadd.f32 %v696, %v814
      %v816 = vpop.f32.mrb[0].mxu0
      %817 = vmatprep.mubr.f32.mxu0 0.0
      %818 = vmatmul.mubr.f32.gmra.mrb[0].mxu0 %v670
      %v819 = vpop.f32.mrb[0].mxu0
      %v820 = vadd.f32 %v696, %v819
      %v821 = vpop.f32.mrb[0].mxu0
      %822 = vmatprep.mubr.f32.mxu0 0.0
      %823 = vmatmul.mubr.f32.gmra.mrb[0].mxu0 %v671
      %v824 = vpop.f32.mrb[0].mxu0
      %v825 = vadd.f32 %v696, %v824
      %v826 = vpop.f32.mrb[0].mxu0
      %827 = vmatprep.mubr.f32.mxu0 0.0
      %828 = vmatmul.mubr.f32.gmra.mrb[0].mxu0 %v672
      %v829 = vpop.f32.mrb[0].mxu0
      %v830 = vadd.f32 %v696, %v829
      %v831 = vpop.f32.mrb[0].mxu0
      %832 = vmatprep.mubr.f32.mxu0 0.0
      %833 = vmatmul.mubr.f32.gmra.mrb[0].mxu0 %v673
      %v834 = vpop.f32.mrb[0].mxu0
      %v835 = vadd.f32 %v696, %v834
      %v836 = vpop.f32.mrb[0].mxu0
      %837 = vmatprep.mubr.f32.mxu0 0.0
      %838 = vmatmul.mubr.f32.gmra.mrb[0].mxu0 %v674
      %v839 = vpop.f32.mrb[0].mxu0
      %v840 = vadd.f32 %v696, %v839
      %v841 = vpop.f32.mrb[0].mxu0
      %842 = vdwg.mxu0
      %843 = vst [vmem:[%s8] sm:$0xff] %v765
      %844 = vst [vmem:[%s8 + $0x8] sm:$0xff] %v770
      %845 = vst [vmem:[%s8 + $0x10] sm:$0xff] %v775
      %846 = vst [vmem:[%s8 + $0x18] sm:$0xff] %v780
      %847 = vst [vmem:[%s8 + $0x20] sm:$0xff] %v785
      %848 = vst [vmem:[%s8 + $0x28] sm:$0xff] %v790
      %849 = vst [vmem:[%s8 + $0x30] sm:$0xff] %v795
      %850 = vst [vmem:[%s8 + $0x38] sm:$0xff] %v800
      %851 = vst [vmem:[%s8 + $0x40] sm:$0xff] %v805
      %852 = vst [vmem:[%s8 + $0x48] sm:$0xff] %v810
      %853 = vst [vmem:[%s8 + $0x50] sm:$0xff] %v815
      %854 = vst [vmem:[%s8 + $0x58] sm:$0xff] %v820
      %855 = vst [vmem:[%s8 + $0x60] sm:$0xff] %v825
      %856 = vst [vmem:[%s8 + $0x68] sm:$0xff] %v830
      %857 = vst [vmem:[%s8 + $0x70] sm:$0xff] %v835
      %858 = vst [vmem:[%s8 + $0x78] sm:$0xff] %v840
    $region45: #{gin_forward.1} parent=1 // pred_fallthru
      _
    // Predicated region
    $region46: #{gin_forward.1} parent=1 // pred_check
      _
    $region47: #{gin_forward.1} parent=1 // pred_check_branch
      %860 = sbr.rel (0) target = $region49
    $region48: #{gin_forward.1} parent=1 // pred_region
      _
    $region49: #{gin_forward.1} parent=1 // pred_fallthru
      _
    // Predicated region
    $region50: #{gin_forward.1} parent=1 // pred_check
      _
    $region51: #{gin_forward.1} parent=1 // pred_check_branch
      %862 = sbr.rel (0) target = $region53
    $region52: #{gin_forward.1} parent=1 // pred_region
      _
    $region53: #{gin_forward.1} parent=1 // pred_fallthru
      _
    %863 = vsyncpa [#allocation4], 1

</llo_original>
